<compile_context>
chip_gen: v7x
topology: tpu7x:2x2x1
jax: 0.10.0
libtpu: 0.0.40
codegen_flags: <defaults>
</compile_context>

<pallas_src>
import jax
import jax.numpy as jnp
from jax.experimental import pallas as pl
from jax.experimental.pallas import tpu as pltpu


def _round_up(n, m):
    return ((n + m - 1) // m) * m


def _linear_kernel(w_ref, b_ref, x_ref, o_ref):
    """VPU-only linear layer in transposed (lane-dense) layout.

    w_ref: SMEM (out_f * in_f,) f32 -- weights, row-major (out_f, in_f)
    b_ref: SMEM (out_f,)        f32 -- bias
    x_ref: VMEM (in_f, BT)      native dtype -- features on sublanes, batch on lanes
    o_ref: VMEM (out_f, BT)     native dtype -- batch on lanes (lane-dense stores)
    """
    in_f = x_ref.shape[0]
    out_f = o_ref.shape[0]
    x = x_ref[...].astype(jnp.float32)                       # upcast in-kernel (free under DMA)
    for r in range(out_f):                                   # out_f == 1 for this module
        acc = x[0:1, :] * w_ref[r * in_f + 0] + b_ref[r]     # scalar*vector FMA on the VPU
        for f in range(1, in_f):                             # 2 more multiply-adds
            acc = acc + x[f:f + 1, :] * w_ref[r * in_f + f]
        o_ref[r:r + 1, :] = acc.astype(o_ref.dtype)


def linear_forward_feature_major(x_t, weight, bias, *,
                                 batch_tile=131072,
                                 min_pallas_batch=32768,
                                 vmem_limit_bytes=48 * 1024 * 1024):
    """nn.Linear(3, 1) on a feature-major activation slab.

    x_t:    (in_f, B) -- batch on the lane axis (no wrapper transpose needed)
    weight: (out_f, in_f) float32
    bias:   (out_f,)      float32
    returns (out_f, B) in x_t.dtype
    """
    in_f, B = x_t.shape
    out_f, w_in = weight.shape
    assert w_in == in_f and bias.shape == (out_f,)

    if B == 0:
        return jnp.zeros((out_f, 0), x_t.dtype)

    if B < min_pallas_batch:
        # Tiny batch: pallas_call launch overhead swamps the work -> plain XLA.
        out = (weight.astype(jnp.float32) @ x_t.astype(jnp.float32)
               + bias.astype(jnp.float32)[:, None])
        return out.astype(x_t.dtype)

    bt = min(_round_up(max(batch_tile, 128), 128), _round_up(B, 128))  # lane tile, mult of 128
    grid = (pl.cdiv(B, bt),)   # boundary block stores are masked by Pallas -> no padding

    return pl.pallas_call(
        _linear_kernel,
        out_shape=jax.ShapeDtypeStruct((out_f, B), x_t.dtype),
        grid=grid,
        in_specs=[
            pl.BlockSpec(memory_space=pltpu.MemorySpace.SMEM),   # weights (scalars)
            pl.BlockSpec(memory_space=pltpu.MemorySpace.SMEM),   # bias (scalar)
            pl.BlockSpec((in_f, bt), lambda i: (0, i)),          # x tile, lane-dense
        ],
        out_specs=pl.BlockSpec((out_f, bt), lambda i: (0, i)),   # lane-dense output
        compiler_params=pltpu.CompilerParams(
            dimension_semantics=("parallel",),                   # megacore shard on v7x
            vmem_limit_bytes=vmem_limit_bytes,                   # <= 64 MiB v7x physical
        ),
    )(weight.reshape(-1).astype(jnp.float32),
      bias.astype(jnp.float32),
      x_t)


def linear_forward(x, weight, bias, **kwargs):
    """Pallas equivalent of nn.Linear(3, 1).forward(x).

    x:      (B, 3) -- batch-major, as in the PyTorch module
    weight: (1, 3) float32
    bias:   (1,)   float32
    returns (B, 1) in x.dtype
    """
    B, in_f = x.shape
    out_f = weight.shape[0]
    if B == 0:
        return jnp.zeros((0, out_f), x.dtype)

    # TODO(synk): produce/store activations feature-major upstream so this transpose
    # (a full extra HBM pass over x) disappears; use linear_forward_feature_major directly.
    x_t = x.T
    out_t = linear_forward_feature_major(x_t, weight, bias, **kwargs)

    if out_f == 1:
        # (1, B) -> (B, 1): bit-identical reshape, no transpose/copy kernel.
        return out_t[0, :].reshape(B, 1)
    return out_t.T


if __name__ == "__main__":
    key = jax.random.PRNGKey(0)
    kx, kw, kb, kx2 = jax.random.split(key, 4)

    B, IN, OUT = 8, 3, 1

    # Deterministic small example matching nn.Linear(3, 1):
    # PyTorch default init is U(-1/sqrt(in_features), 1/sqrt(in_features)).
    x = jax.random.normal(kx, (B, IN), dtype=jnp.float32)
    bound = 1.0 / jnp.sqrt(jnp.float32(IN))
    weight = jax.random.uniform(kw, (OUT, IN), jnp.float32, -bound, bound)
    bias = jax.random.uniform(kb, (OUT,), jnp.float32, -bound, bound)

    # Force the Pallas path even at tiny B so the kernel actually runs here.
    out = jax.block_until_ready(linear_forward(x, weight, bias, min_pallas_batch=0))
    ref = x @ weight.T + bias
    assert out.shape == (B, OUT)
    assert jnp.allclose(out, ref, atol=1e-5, rtol=1e-5)

    # Exercise the multi-step grid + masked boundary block (B not a multiple of the tile).
    B2 = 1003
    x2 = jax.random.normal(kx2, (B2, IN), dtype=jnp.float32)
    out2 = jax.block_until_ready(
        linear_forward(x2, weight, bias, batch_tile=256, min_pallas_batch=0))
    ref2 = x2 @ weight.T + bias
    assert out2.shape == (B2, OUT)
    assert jnp.allclose(out2, ref2, atol=1e-5, rtol=1e-5)

    print("KERNEL_OK")
</pallas_src>

<mosaic_0001>
module attributes {stable_mosaic.version = 11 : i64} {
  func.func @_linear_kernel(%arg0: i32, %arg1: memref<3xf32, #tpu.memory_space<smem>>, %arg2: memref<1xf32, #tpu.memory_space<smem>>, %arg3: memref<3x128xf32, #tpu.memory_space<vmem>>, %arg4: memref<1x128xf32, #tpu.memory_space<vmem>>) attributes {dimension_semantics = [#tpu.dimension_semantics<parallel>], iteration_bounds = array<i64: 1>, scalar_prefetch = 0 : i64, scratch_operands = 0 : i64, tpu.core_type = #tpu.core_type<tc>, window_params = [{transform_indices = @transform_0, window_bounds = array<i64: 3>}, {transform_indices = @transform_1, window_bounds = array<i64: 1>}, {transform_indices = @transform_2, window_bounds = array<i64: 3, 128>}, {transform_indices = @transform_3, window_bounds = array<i64: 1, 128>}]} {
    %c0 = arith.constant 0 : index
    %c0_0 = arith.constant 0 : index
    %0 = vector.load %arg3[%c0, %c0_0] : memref<3x128xf32, #tpu.memory_space<vmem>>, vector<3x128xf32>
    %1 = vector.extract_strided_slice %0 {offsets = [0, 0], sizes = [1, 128], strides = [1, 1]} : vector<3x128xf32> to vector<1x128xf32>
    %c0_1 = arith.constant 0 : index
    %2 = memref.load %arg1[%c0_1] : memref<3xf32, #tpu.memory_space<smem>>
    %3 = vector.broadcast %2 : f32 to vector<1x128xf32>
    %4 = arith.mulf %1, %3 : vector<1x128xf32>
    %c0_2 = arith.constant 0 : index
    %5 = memref.load %arg2[%c0_2] : memref<1xf32, #tpu.memory_space<smem>>
    %6 = vector.broadcast %5 : f32 to vector<1x128xf32>
    %7 = arith.addf %4, %6 : vector<1x128xf32>
    %8 = vector.extract_strided_slice %0 {offsets = [1, 0], sizes = [1, 128], strides = [1, 1]} : vector<3x128xf32> to vector<1x128xf32>
    %c1 = arith.constant 1 : index
    %9 = memref.load %arg1[%c1] : memref<3xf32, #tpu.memory_space<smem>>
    %10 = vector.broadcast %9 : f32 to vector<1x128xf32>
    %11 = arith.mulf %8, %10 : vector<1x128xf32>
    %12 = arith.addf %7, %11 : vector<1x128xf32>
    %13 = vector.extract_strided_slice %0 {offsets = [2, 0], sizes = [1, 128], strides = [1, 1]} : vector<3x128xf32> to vector<1x128xf32>
    %c2 = arith.constant 2 : index
    %14 = memref.load %arg1[%c2] : memref<3xf32, #tpu.memory_space<smem>>
    %15 = vector.broadcast %14 : f32 to vector<1x128xf32>
    %16 = arith.mulf %13, %15 : vector<1x128xf32>
    %17 = arith.addf %12, %16 : vector<1x128xf32>
    %c0_3 = arith.constant 0 : index
    %c0_4 = arith.constant 0 : index
    %18 = vector.load %arg4[%c0_3, %c0_4] : memref<1x128xf32, #tpu.memory_space<vmem>>, vector<1x128xf32>
    tpu.vector_store %arg4[%c0_3, %c0_4], %17 {strides = array<i32>} : memref<1x128xf32, #tpu.memory_space<vmem>>, vector<1x128xf32>,
    return
  }
  func.func @transform_0(%arg0: i32) -> i32 {
    %c0_i32 = arith.constant 0 : i32
    %c0_i32_0 = arith.constant 0 : i32
    return %c0_i32 : i32
  }
  func.func @transform_1(%arg0: i32) -> i32 {
    %c0_i32 = arith.constant 0 : i32
    %c0_i32_0 = arith.constant 0 : i32
    return %c0_i32 : i32
  }
  func.func @transform_2(%arg0: i32) -> (i32, i32) {
    %c0_i32 = arith.constant 0 : i32
    %c0_i32_0 = arith.constant 0 : i32
    return %c0_i32, %arg0 : i32, i32
  }
  func.func @transform_3(%arg0: i32) -> (i32, i32) {
    %c0_i32 = arith.constant 0 : i32
    %c0_i32_0 = arith.constant 0 : i32
    return %c0_i32, %arg0 : i32, i32
  }
}

</mosaic_0001>

<llo_original>
// kernel: tpu_custom_call.1
$region0: #{tpu_custom_call.1}
  #allocation0 [shape = 'u32[]', space=smem, size = 0x4, offset = 0x4, fixed_abs, tag = 'smem constant byte address 0x4 - core index']
  #allocation1 [shape = 'u32[144,128]{1,0:T(1,128)}', space=vmem, size = 0x12000, scoped, tag = 'internal scratch']
  #allocation2 [shape = 'f32[1]{0:T(128)S(6)}', space=smem, size = 0x200, scoped, tag = 'scoped memory for tpu_custom_call.1']
  %s0 = inlined_call_operand.vmem [shape: f32[3], index: 0, kind: input, shape index: {}]
  %s1 = inlined_call_operand.<no memory space> [shape: f32[1], index: 1, kind: input, shape index: {}]
  %s2 = inlined_call_operand.vmem [shape: f32[3,8], index: 2, kind: input, shape index: {}]
  %s3 = inlined_call_operand.hbm [shape: f32[1,8], index: 3, kind: output, shape index: {}]
  %s4 = sld [smem:[#allocation0]]
  $region26: #{tpu_custom_call.1} parent=0
    _
  %s6 = ssub.s32 1, %s4
  %s7 = scalar_select 0, %s6, %s4
  %8 = sst [smem:[#allocation2]] %s1
  $region1: #{tpu_custom_call.1} parent=0
    #allocation3 [shape = 'u8[512]{0}', space=smem, size = 0x200, scoped, tag = 'input window, operand 0, single buffered']
    #allocation4 [shape = 's32[1]{0}', space=sflag, size = 0x4, scoped, tag = 'scoped memory for tpu_custom_call.1']
    #allocation5 [shape = 's32[1]{0}', space=sflag, size = 0x4, scoped, tag = 'scoped memory for tpu_custom_call.1']
    #allocation6 [shape = 'u8[512]{0}', space=vmem, size = 0x400, scoped, tag = 'output window, operand 0, single buffered']
    %9 = vsyncpa [#allocation5], 0
    %10 = vsyncpa [#allocation4], 0
    // Predicated region
    $region2: #{tpu_custom_call.1} parent=1 // pred_check
      _
    $region3: #{tpu_custom_call.1} parent=1 // pred_check_branch
      %12 = sbr.rel (0) target = $region5
    $region4: #{tpu_custom_call.1} parent=1 // pred_region
      %s14 = ssub.s32 16, 16
      %15 = vsyncadd [#allocation5], %s14
      %s17 = sshll.u32 %s0, 4
      %s18 = int_to_ptr.vmem [resolvable:$true] %s17
      %20 = dma.vmem_to_smem %s18, 16, [#allocation3], [#allocation5]
    $region5: #{tpu_custom_call.1} parent=1 // pred_fallthru
      _
    // Predicated region
    $region6: #{tpu_custom_call.1} parent=1 // pred_check
      _
    $region7: #{tpu_custom_call.1} parent=1 // pred_check_branch
      %22 = sbr.rel (0) target = $region9
    $region8: #{tpu_custom_call.1} parent=1 // pred_region
      _
    $region9: #{tpu_custom_call.1} parent=1 // pred_fallthru
      _
    // Predicated region
    $region10: #{tpu_custom_call.1} parent=1 // pred_check
      _
    $region11: #{tpu_custom_call.1} parent=1 // pred_check_branch
      %24 = sbr.rel (0) target = $region13
    $region12: #{tpu_custom_call.1} parent=1 // pred_region
      _
    $region13: #{tpu_custom_call.1} parent=1 // pred_fallthru
      _
    // Predicated region
    $region14: #{tpu_custom_call.1} parent=1 // pred_check
      _
    $region15: #{tpu_custom_call.1} parent=1 // pred_check_branch
      %26 = sbr.rel (0) target = $region17
    $region16: #{tpu_custom_call.1} parent=1 // pred_region
      %27 = dma.done [#allocation5], 16
    $region17: #{tpu_custom_call.1} parent=1 // pred_fallthru
      _
    %28 = sfence
    %v29 = vld [vmem:[%s2] sm:$0x7]
    %s30 = sld [smem:[#allocation3]]
    %v31 = vstv %s30
    %v32 = vmul.f32 %v29, %v31
    %s33 = sld [smem:[#allocation2]]
    %v34 = vstv %s33
    %v35 = vadd.f32 %v32, %v34
    %s36 = sld [smem:[#allocation3 + $0x1]]
    %v37 = vstv %s36
    %v38 = vmul.f32 %v29, %v37
    %v40 = vrot.slane %v38, 1
    %v42 = vadd.f32 %v35, %v40
    %s43 = sld [smem:[#allocation3 + $0x2]]
    %v44 = vstv %s43
    %v45 = vmul.f32 %v29, %v44
    %v47 = vrot.slane %v45, 2
    %v49 = vadd.f32 %v42, %v47
    %50 = vst [vmem:[#allocation6] sm:$0x1] %v49
    // Predicated region
    $region18: #{tpu_custom_call.1} parent=1 // pred_check
      _
    $region19: #{tpu_custom_call.1} parent=1 // pred_check_branch
      %52 = sbr.rel (0) target = $region21
    $region20: #{tpu_custom_call.1} parent=1 // pred_region
      %s54 = ssub.s32 16, 16
      %55 = vsyncadd [#allocation4], %s54
      %s57 = sshll.u32 [#allocation6], 4
      %s58 = int_to_ptr.vmem [resolvable:$true] %s57
      %60 = dma.vmem_to_hbm [thread:$0]  %s58, 16, %s3, [#allocation4]
    $region21: #{tpu_custom_call.1} parent=1 // pred_fallthru
      _
    // Predicated region
    $region22: #{tpu_custom_call.1} parent=1 // pred_check
      _
    $region23: #{tpu_custom_call.1} parent=1 // pred_check_branch
      %62 = sbr.rel (0) target = $region25
    $region24: #{tpu_custom_call.1} parent=1 // pred_region
      %63 = dma.done [#allocation4], 16
    $region25: #{tpu_custom_call.1} parent=1 // pred_fallthru
      _
    %64 = vsyncpa [#allocation4], 1
    %65 = vsyncpa [#allocation5], 1

</llo_original>
